<compile_context>
chip_gen: v6e
topology: v6e:2x2x1
jax: 0.10.0
libtpu: 0.0.40
codegen_flags: <defaults>
</compile_context>

<pallas_src>
import jax
import jax.numpy as jnp
from jax.experimental import pallas as pl
from jax.experimental.pallas import tpu as pltpu


def _hbm_copy_kernel(src_hbm, dst_hbm, sem):
    # Single whole-array HBM->HBM DMA: no VMEM round trip, no grid steps.
    cp = pltpu.make_async_copy(src_hbm, dst_hbm, sem)
    cp.start()
    cp.wait()


def _dma_copy(x: jax.Array) -> jax.Array:
    return pl.pallas_call(
        _hbm_copy_kernel,
        out_shape=jax.ShapeDtypeStruct(x.shape, x.dtype),
        in_specs=[pl.BlockSpec(memory_space=pl.ANY)],   # raw HBM ref, no auto-DMA
        out_specs=pl.BlockSpec(memory_space=pl.ANY),    # raw HBM ref, no auto-DMA
        scratch_shapes=[pltpu.SemaphoreType.DMA(())],
    )(x)


def learnable_add_forward(add_tensor: jax.Array) -> jax.Array:
    """Pallas equivalent of LearnableAdd.forward(): returns the parameter."""
    if add_tensor.ndim == 0:
        # Give the DMA a 1-D view of the scalar, then restore the 0-D shape.
        return _dma_copy(add_tensor.reshape(1)).reshape(())
    return _dma_copy(add_tensor)


if __name__ == "__main__":
    # Deterministic parameter init mimicking torch.rand(shape): uniform [0, 1).
    # (Bit-exact reproduction of torch's RNG is not attempted — init only.)
    shape = (8, 128)  # small, TPU-tile-aligned parameter shape
    key = jax.random.PRNGKey(0)
    add_tensor = jax.random.uniform(key, shape, dtype=jnp.float32)

    out = learnable_add_forward(add_tensor)
    out = jax.block_until_ready(out)

    # Correctness: forward() must return the parameter exactly (bit-exact copy).
    assert out.shape == add_tensor.shape
    assert out.dtype == add_tensor.dtype
    assert bool(jnp.array_equal(out, add_tensor))

    print("KERNEL_OK")
</pallas_src>

<mosaic_0001>
module attributes {stable_mosaic.version = 11 : i64} {
  func.func @_hbm_copy_kernel(%arg0: memref<8x128xf32, #tpu.memory_space<any>>, %arg1: memref<8x128xf32, #tpu.memory_space<any>>, %arg2: memref<!tpu.dma_semaphore, #tpu.memory_space<semaphore_mem>>) attributes {dimension_semantics = [], scalar_prefetch = 0 : i64, scratch_operands = 1 : i64, tpu.core_type = #tpu.core_type<tc>} {
    tpu.enqueue_dma source(%arg0 : memref<8x128xf32, #tpu.memory_space<any>>) target(%arg1 : memref<8x128xf32, #tpu.memory_space<any>>) target_semaphore(%arg2 : memref<!tpu.dma_semaphore, #tpu.memory_space<semaphore_mem>>)
    tpu.wait_dma2 semaphore(%arg2 : memref<!tpu.dma_semaphore, #tpu.memory_space<semaphore_mem>>) src(%arg0 : memref<8x128xf32, #tpu.memory_space<any>>) dst(%arg1 : memref<8x128xf32, #tpu.memory_space<any>>)
    return
  }
}

</mosaic_0001>

<llo_original>
// kernel: tpu_custom_call.1
$region0: #{tpu_custom_call.1}
  #allocation0 [shape = 'u32[]', space=smem, size = 0x4, offset = 0x4, fixed_abs, tag = 'smem constant byte address 0x4 - core index']
  #allocation1 [shape = 'u32[144,128]{1,0:T(1,128)}', space=vmem, size = 0x12000, scoped, tag = 'internal scratch']
  #allocation2 [shape = 's32[1]{0}', space=sflag, size = 0x4, scoped, tag = 'scratch operand']
  #allocation3 [shape = 's32[]', space=sflag, size = 0x4, offset = 0, fixed_abs, tag = 'sflag constant byte address 0x0 - dummy sync flag']
  #allocation4 [shape = 'u32[0]{0}', space=smem, size = 0, offset = 0, fixed_abs, tag = 'smem constant byte address 0x0 - null']
  %s0 = inlined_call_operand.hbm [shape: f32[8,128], index: 0, kind: input, shape index: {}]
  %s1 = inlined_call_operand.hbm [shape: f32[8,128], index: 1, kind: output, shape index: {}]
  %s2 = sld [smem:[#allocation0]]
  $region2: #{tpu_custom_call.1} parent=0
    _
  %s4 = ssub.s32 1, %s2
  %s5 = scalar_select 0, %s4, %s2
  %s7 = sshll.u32 1, 14
  %s8 = sxor.u32 4294967295, %s7
  %12 = dma.general %s0, 128, %s1, [#allocation2], 131072, [#allocation4], 0, 0
  %s13 = smul.u32 8, 1
  %s14 = sshll.u32 %s13, 4
  %15 = dma.done [#allocation2], %s14
  %16 = vsyncmov [#allocation2]
  %s17 = vpop.sfrf %16
  %p18 = scmp.eq.s32.totalorder %s17, 0
  %p19 = pneg %p18
  %21 = shalt.err (%p19)

</llo_original>
